<compile_context>
chip_gen: v5e
topology: v5e:2x2
jax: 0.10.0
libtpu: 0.0.40
codegen_flags: <defaults>
</compile_context>

<pallas_src>
import math
from functools import partial

import jax
import jax.numpy as jnp
from jax.experimental import pallas as pl
from jax.experimental.pallas import tpu as pltpu

EPS = 1e-12  # torch F.normalize default eps


def _vmem_limit_bytes():
    """~75% of physical VMEM: ~48 MiB on v7x (64 MiB/TC), ~96 MiB on v5e/v6e (128 MiB)."""
    try:
        cap = int(pltpu.get_tpu_info().vmem_capacity_bytes)
    except Exception:
        cap = 64 * 1024 * 1024
    return (cap * 3) // 4


# ---------------------------------------------------------------------------
# Fully fused kernel: RMSNorm -> qkv 1x1 conv -> linear attention -> out 1x1 conv -> RMSNorm
# One grid step = one (batch, head). Heads is the innermost reduction ("arbitrary") axis.
# ---------------------------------------------------------------------------
def _fused_linear_attention_kernel(
    x_ref,        # (C, HW)        input pixels for this batch (same block across heads)
    g_in_ref,     # (C, 1)         RMSNorm_in gain, pre-scaled by sqrt(C)
    wqkv_ref,     # (3*D, C)       this head's qkv projection rows [q; k; v]
    wout_ref,     # (C, D)         this head's columns of the output 1x1 conv
    b_out_ref,    # (C, 1)         output conv bias
    g_out_ref,    # (C, 1)         RMSNorm_out gain, pre-scaled by sqrt(C)
    o_ref,        # (C, HW)        final output block (written only at the last head)
    xn_ref,       # (C, HW) f32    VMEM scratch: RMSNorm'd input (computed once per batch)
    acc_ref,      # (C, HW) f32    VMEM scratch: out-projection accumulator across heads
    *, dim_head, scale,
):
    h = pl.program_id(1)
    n_heads = pl.num_programs(1)
    D = dim_head

    # --- per-batch init (head 0): RMSNorm_in once, bias-initialized accumulator -----------
    @pl.when(h == 0)
    def _():
        x = x_ref[...].astype(jnp.float32)
        ss = jnp.sum(x * x, axis=0, keepdims=True)                     # (1, HW)
        inv = jnp.minimum(jax.lax.rsqrt(ss), 1.0 / EPS)                # 1/max(||x||, eps), EUP rsqrt
        xn_ref[...] = x * inv * g_in_ref[...]                          # * g * sqrt(C) (pre-folded)
        acc_ref[...] = jnp.broadcast_to(b_out_ref[...], acc_ref.shape)  # conv bias added exactly once

    # --- this head's q/k/v, straight from VMEM (no HBM qkv intermediate) -------------------
    x_n = xn_ref[...]
    qkv = jnp.dot(wqkv_ref[...].astype(jnp.float32), x_n,
                  preferred_element_type=jnp.float32)                  # (3D, HW) on the MXU
    q = qkv[0:D, :]
    k = qkv[D:2 * D, :]
    v = qkv[2 * D:3 * D, :]

    # softmax over the feature axis (torch dim=-2 -> axis 0); scale folded into the reciprocal
    q = jnp.exp(q - jnp.max(q, axis=0, keepdims=True))
    q_inv = pl.reciprocal(jnp.sum(q, axis=0, keepdims=True), approx=False) * scale   # (1, HW)
    q = q * q_inv

    # softmax over the spatial axis (torch dim=-1 -> axis 1)
    k = jnp.exp(k - jnp.max(k, axis=1, keepdims=True))
    k_inv = pl.reciprocal(jnp.sum(k, axis=1, keepdims=True), approx=False)            # (D, 1)
    k = k * k_inv

    # context^T[e, d] = sum_n v[e, n] * k[d, n]
    context_t = jax.lax.dot_general(v, k, (((1,), (1,)), ((), ())),
                                    preferred_element_type=jnp.float32)               # (D, D)
    # out_h[e, n] = sum_d context[d, e] * q[d, n]
    out_h = jnp.dot(context_t, q, preferred_element_type=jnp.float32)                 # (D, HW)

    # --- accumulate this head's contribution to the 1x1 output conv ------------------------
    acc_ref[...] += jnp.dot(wout_ref[...].astype(jnp.float32), out_h,
                            preferred_element_type=jnp.float32)                       # (C, HW)

    # --- finalize (last head): RMSNorm_out and the single HBM write ------------------------
    @pl.when(h == n_heads - 1)
    def _():
        y = acc_ref[...]
        ss = jnp.sum(y * y, axis=0, keepdims=True)
        inv = jnp.minimum(jax.lax.rsqrt(ss), 1.0 / EPS)
        o_ref[...] = (y * inv * g_out_ref[...]).astype(o_ref.dtype)


# ---------------------------------------------------------------------------
# Wrapper: weight re-layout + single pallas_call
# ---------------------------------------------------------------------------
def linear_attention_2d(x, params, *, heads, dim_head):
    N, C, H, W = x.shape
    HW = H * W
    D = dim_head
    scale = D ** (-0.5)

    x_flat = x.reshape(N, C, HW)

    # Fold sqrt(C) into both RMSNorm gains (one fewer multiply per element in-kernel).
    g_in = (params["g_in"].reshape(C, 1) * math.sqrt(C)).astype(jnp.float32)
    g_out = (params["g_out"].reshape(C, 1) * math.sqrt(C)).astype(jnp.float32)
    b_out = params["b_out"].reshape(C, 1).astype(jnp.float32)

    # to_qkv weight (3*hidden, C): row index = which*hidden + h*D + d  -> (heads, 3*D, C)
    w_qkv_heads = jnp.transpose(
        params["w_qkv"].reshape(3, heads, D, C), (1, 0, 2, 3)
    ).reshape(heads, 3 * D, C).astype(jnp.float32)

    # to_out weight (C, hidden): column index = h*D + e  -> (heads, C, D)
    w_out_heads = jnp.transpose(
        params["w_out"].reshape(C, heads, D), (1, 0, 2)
    ).astype(jnp.float32)

    out_flat = pl.pallas_call(
        partial(_fused_linear_attention_kernel, dim_head=D, scale=scale),
        out_shape=jax.ShapeDtypeStruct((N, C, HW), x.dtype),
        grid_spec=pltpu.PrefetchScalarGridSpec(
            num_scalar_prefetch=0,
            grid=(N, heads),
            in_specs=[
                pl.BlockSpec((None, C, HW), lambda b, h: (b, 0, 0)),     # x (constant across heads)
                pl.BlockSpec((C, 1), lambda b, h: (0, 0)),               # g_in * sqrt(C)
                pl.BlockSpec((None, 3 * D, C), lambda b, h: (h, 0, 0)),  # per-head qkv rows
                pl.BlockSpec((None, C, D), lambda b, h: (h, 0, 0)),      # per-head out-proj cols
                pl.BlockSpec((C, 1), lambda b, h: (0, 0)),               # b_out
                pl.BlockSpec((C, 1), lambda b, h: (0, 0)),               # g_out * sqrt(C)
            ],
            out_specs=pl.BlockSpec((None, C, HW), lambda b, h: (b, 0, 0)),
            scratch_shapes=[
                pltpu.VMEM((C, HW), jnp.float32),   # RMSNorm'd input, computed once per batch
                pltpu.VMEM((C, HW), jnp.float32),   # out-projection accumulator
            ],
        ),
        compiler_params=pltpu.CompilerParams(
            dimension_semantics=("parallel", "arbitrary"),
            vmem_limit_bytes=_vmem_limit_bytes(),
        ),
    )(x_flat, g_in, w_qkv_heads, w_out_heads, b_out, g_out)
    return out_flat.reshape(N, C, H, W)


# ---------------------------------------------------------------------------
# Pure-JAX reference (mirrors the PyTorch module)
# ---------------------------------------------------------------------------
def _rms_ref(x, g):
    C = x.shape[1]
    nrm = jnp.sqrt(jnp.sum(x * x, axis=1, keepdims=True))
    nrm = jnp.maximum(nrm, EPS)
    return x / nrm * g * math.sqrt(C)


def linear_attention_2d_ref(x, params, *, heads, dim_head):
    N, C, H, W = x.shape
    n = H * W
    hidden = heads * dim_head
    scale = dim_head ** (-0.5)
    hp = jax.lax.Precision.HIGHEST

    xf = x.astype(jnp.float32)
    xn = _rms_ref(xf, params["g_in"])
    qkv = jnp.einsum("oc,bchw->bohw", params["w_qkv"], xn, precision=hp)
    qkv = qkv.reshape(N, 3, heads, dim_head, n)
    q, k, v = qkv[:, 0], qkv[:, 1], qkv[:, 2]
    q = jax.nn.softmax(q, axis=-2) * scale
    k = jax.nn.softmax(k, axis=-1)
    context = jnp.einsum("bhdn,bhen->bhde", k, v, precision=hp)
    out = jnp.einsum("bhde,bhdn->bhen", context, q, precision=hp)
    out = out.reshape(N, hidden, H, W)
    out = jnp.einsum("oc,bchw->bohw", params["w_out"], out, precision=hp)
    out = out + params["b_out"].reshape(1, C, 1, 1)
    out = _rms_ref(out, params["g_out"])
    return out.astype(x.dtype)


if __name__ == "__main__":
    key = jax.random.PRNGKey(0)
    N, dim, H, W = 2, 4, 16, 16
    heads, dim_head = 4, 32
    hidden = heads * dim_head

    k_x, k_qkv, k_out, k_b = jax.random.split(key, 4)
    x = jax.random.normal(k_x, (N, dim, H, W), dtype=jnp.float32)
    params = {
        "g_in": jnp.ones((1, dim, 1, 1), jnp.float32),   # nn.Parameter(torch.ones(1, dim, 1, 1))
        "w_qkv": 0.2 * jax.random.normal(k_qkv, (3 * hidden, dim), dtype=jnp.float32),
        "w_out": 0.2 * jax.random.normal(k_out, (dim, hidden), dtype=jnp.float32),
        "b_out": 0.05 * jax.random.normal(k_b, (dim,), dtype=jnp.float32),
        "g_out": jnp.ones((1, dim, 1, 1), jnp.float32),
    }

    out = linear_attention_2d(x, params, heads=heads, dim_head=dim_head)
    out = jax.block_until_ready(out)

    ref = linear_attention_2d_ref(x, params, heads=heads, dim_head=dim_head)
    assert out.shape == (N, dim, H, W)
    max_err = jnp.max(jnp.abs(out - ref))
    assert jnp.allclose(out, ref, atol=1e-4, rtol=1e-4), f"mismatch vs reference, max abs err={max_err}"

    print("KERNEL_OK")
</pallas_src>

<mosaic_0001>
module attributes {stable_mosaic.version = 11 : i64} {
  func.func @_fused_linear_attention_kernel(%arg0: i32, %arg1: i32, %arg2: memref<1x4x256xf32, #tpu.memory_space<vmem>>, %arg3: memref<4x1xf32, #tpu.memory_space<vmem>>, %arg4: memref<1x96x4xf32, #tpu.memory_space<vmem>>, %arg5: memref<1x4x32xf32, #tpu.memory_space<vmem>>, %arg6: memref<4x1xf32, #tpu.memory_space<vmem>>, %arg7: memref<4x1xf32, #tpu.memory_space<vmem>>, %arg8: memref<1x4x256xf32, #tpu.memory_space<vmem>>, %arg9: memref<4x256xf32, #tpu.memory_space<vmem>>, %arg10: memref<4x256xf32, #tpu.memory_space<vmem>>) attributes {dimension_semantics = [#tpu.dimension_semantics<parallel>, #tpu.dimension_semantics<arbitrary>], iteration_bounds = array<i64: 2, 4>, scalar_prefetch = 0 : i64, scratch_operands = 2 : i64, tpu.core_type = #tpu.core_type<tc>, window_params = [{transform_indices = @transform_0, window_bounds = array<i64: 1, 4, 256>}, {pipeline_mode = #tpu.pipeline_mode<synchronous>, transform_indices = @transform_1, window_bounds = array<i64: 4, 1>}, {transform_indices = @transform_2, window_bounds = array<i64: 1, 96, 4>}, {transform_indices = @transform_3, window_bounds = array<i64: 1, 4, 32>}, {pipeline_mode = #tpu.pipeline_mode<synchronous>, transform_indices = @transform_4, window_bounds = array<i64: 4, 1>}, {pipeline_mode = #tpu.pipeline_mode<synchronous>, transform_indices = @transform_5, window_bounds = array<i64: 4, 1>}, {transform_indices = @transform_6, window_bounds = array<i64: 1, 4, 256>}]} {
    %c0_i32 = arith.constant 0 : i32
    %0 = arith.cmpi eq, %arg1, %c0_i32 : i32
    %1 = arith.extui %0 : i1 to i32
    %c0_i32_0 = arith.constant 0 : i32
    %2 = arith.cmpi ne, %1, %c0_i32_0 : i32
    scf.if %2 {
      %c0_21 = arith.constant 0 : index
      %c0_22 = arith.constant 0 : index
      %c0_23 = arith.constant 0 : index
      %43 = vector.load %arg2[%c0_21, %c0_22, %c0_23] : memref<1x4x256xf32, #tpu.memory_space<vmem>>, vector<1x4x256xf32>
      %44 = vector.shape_cast %43 : vector<1x4x256xf32> to vector<4x256xf32>
      %45 = arith.mulf %44, %44 : vector<4x256xf32>
      %cst_24 = arith.constant dense<0.000000e+00> : vector<256xf32>
      %46 = vector.multi_reduction <add>, %45, %cst_24 [0] : vector<4x256xf32> to vector<256xf32>
      %47 = vector.shape_cast %46 : vector<256xf32> to vector<1x256xf32>
      %48 = math.rsqrt %47 : vector<1x256xf32>
      %cst_25 = arith.constant 9.99999995E+11 : f32
      %49 = vector.broadcast %cst_25 : f32 to vector<1x256xf32>
      %50 = arith.minimumf %48, %49 : vector<1x256xf32>
      %51 = vector.broadcast %50 : vector<1x256xf32> to vector<4x256xf32>
      %52 = arith.mulf %44, %51 : vector<4x256xf32>
      %c0_26 = arith.constant 0 : index
      %c0_27 = arith.constant 0 : index
      %53 = vector.load %arg3[%c0_26, %c0_27] : memref<4x1xf32, #tpu.memory_space<vmem>>, vector<4x1xf32>
      %54 = vector.broadcast %53 : vector<4x1xf32> to vector<4x256xf32>
      %55 = arith.mulf %52, %54 : vector<4x256xf32>
      %c0_28 = arith.constant 0 : index
      %c0_29 = arith.constant 0 : index
      %56 = vector.load %arg9[%c0_28, %c0_29] : memref<4x256xf32, #tpu.memory_space<vmem>>, vector<4x256xf32>
      tpu.vector_store %arg9[%c0_28, %c0_29], %55 {strides = array<i32>} : memref<4x256xf32, #tpu.memory_space<vmem>>, vector<4x256xf32>,
      %c0_30 = arith.constant 0 : index
      %c0_31 = arith.constant 0 : index
      %57 = vector.load %arg6[%c0_30, %c0_31] : memref<4x1xf32, #tpu.memory_space<vmem>>, vector<4x1xf32>
      %58 = vector.shape_cast %57 : vector<4x1xf32> to vector<4x1xf32>
      %59 = vector.broadcast %58 : vector<4x1xf32> to vector<4x256xf32>
      %c0_32 = arith.constant 0 : index
      %c0_33 = arith.constant 0 : index
      %60 = vector.load %arg10[%c0_32, %c0_33] : memref<4x256xf32, #tpu.memory_space<vmem>>, vector<4x256xf32>
      tpu.vector_store %arg10[%c0_32, %c0_33], %59 {strides = array<i32>} : memref<4x256xf32, #tpu.memory_space<vmem>>, vector<4x256xf32>,
    } else {
    }
    %c0 = arith.constant 0 : index
    %c0_1 = arith.constant 0 : index
    %3 = vector.load %arg9[%c0, %c0_1] : memref<4x256xf32, #tpu.memory_space<vmem>>, vector<4x256xf32>
    %c0_2 = arith.constant 0 : index
    %c0_3 = arith.constant 0 : index
    %c0_4 = arith.constant 0 : index
    %4 = vector.load %arg4[%c0_2, %c0_3, %c0_4] : memref<1x96x4xf32, #tpu.memory_space<vmem>>, vector<1x96x4xf32>
    %5 = vector.shape_cast %4 : vector<1x96x4xf32> to vector<96x4xf32>
    %cst = arith.constant dense<0.000000e+00> : vector<96x256xf32>
    %6 = tpu.matmul %5, %3, %cst {dimension_numbers = #tpu.dot_dimension_numbers<[1], [0], [0], [1], [0, 0, 1, 1], [], []>} : vector<96x4xf32>, vector<4x256xf32>, vector<96x256xf32> -> vector<96x256xf32>
    %7 = vector.extract_strided_slice %6 {offsets = [0, 0], sizes = [32, 256], strides = [1, 1]} : vector<96x256xf32> to vector<32x256xf32>
    %8 = vector.extract_strided_slice %6 {offsets = [32, 0], sizes = [32, 256], strides = [1, 1]} : vector<96x256xf32> to vector<32x256xf32>
    %9 = vector.extract_strided_slice %6 {offsets = [64, 0], sizes = [32, 256], strides = [1, 1]} : vector<96x256xf32> to vector<32x256xf32>
    %cst_5 = arith.constant dense<0xFF800000> : vector<256xf32>
    %10 = vector.multi_reduction <maximumf>, %7, %cst_5 [0] : vector<32x256xf32> to vector<256xf32>
    %11 = vector.shape_cast %10 : vector<256xf32> to vector<1x256xf32>
    %12 = vector.broadcast %11 : vector<1x256xf32> to vector<32x256xf32>
    %13 = arith.subf %7, %12 : vector<32x256xf32>
    %14 = math.exp %13 : vector<32x256xf32>
    %cst_6 = arith.constant dense<0.000000e+00> : vector<256xf32>
    %15 = vector.multi_reduction <add>, %14, %cst_6 [0] : vector<32x256xf32> to vector<256xf32>
    %16 = vector.shape_cast %15 : vector<256xf32> to vector<1x256xf32>
    %17 = tpu.reciprocal %16 : vector<1x256xf32> -> vector<1x256xf32>
    %cst_7 = arith.constant 0.176776692 : f32
    %18 = vector.broadcast %cst_7 : f32 to vector<1x256xf32>
    %19 = arith.mulf %17, %18 : vector<1x256xf32>
    %20 = vector.broadcast %19 : vector<1x256xf32> to vector<32x256xf32>
    %21 = arith.mulf %14, %20 : vector<32x256xf32>
    %cst_8 = arith.constant dense<0xFF800000> : vector<32xf32>
    %22 = vector.multi_reduction <maximumf>, %8, %cst_8 [1] : vector<32x256xf32> to vector<32xf32>
    %23 = vector.shape_cast %22 : vector<32xf32> to vector<32x1xf32>
    %24 = vector.broadcast %23 : vector<32x1xf32> to vector<32x256xf32>
    %25 = arith.subf %8, %24 : vector<32x256xf32>
    %26 = math.exp %25 : vector<32x256xf32>
    %cst_9 = arith.constant dense<0.000000e+00> : vector<32xf32>
    %27 = vector.multi_reduction <add>, %26, %cst_9 [1] : vector<32x256xf32> to vector<32xf32>
    %28 = vector.shape_cast %27 : vector<32xf32> to vector<32x1xf32>
    %29 = tpu.reciprocal %28 : vector<32x1xf32> -> vector<32x1xf32>
    %30 = vector.broadcast %29 : vector<32x1xf32> to vector<32x256xf32>
    %31 = arith.mulf %26, %30 : vector<32x256xf32>
    %cst_10 = arith.constant dense<0.000000e+00> : vector<32x32xf32>
    %32 = tpu.matmul %9, %31, %cst_10 {dimension_numbers = #tpu.dot_dimension_numbers<[1], [1], [0], [0], [0, 0, 1, 0], [], []>} : vector<32x256xf32>, vector<32x256xf32>, vector<32x32xf32> -> vector<32x32xf32>
    %cst_11 = arith.constant dense<0.000000e+00> : vector<32x256xf32>
    %33 = tpu.matmul %32, %21, %cst_11 {dimension_numbers = #tpu.dot_dimension_numbers<[1], [0], [0], [1], [0, 0, 1, 1], [], []>} : vector<32x32xf32>, vector<32x256xf32>, vector<32x256xf32> -> vector<32x256xf32>
    %c0_12 = arith.constant 0 : index
    %c0_13 = arith.constant 0 : index
    %34 = vector.load %arg10[%c0_12, %c0_13] : memref<4x256xf32, #tpu.memory_space<vmem>>, vector<4x256xf32>
    %c0_14 = arith.constant 0 : index
    %c0_15 = arith.constant 0 : index
    %c0_16 = arith.constant 0 : index
    %35 = vector.load %arg5[%c0_14, %c0_15, %c0_16] : memref<1x4x32xf32, #tpu.memory_space<vmem>>, vector<1x4x32xf32>
    %36 = vector.shape_cast %35 : vector<1x4x32xf32> to vector<4x32xf32>
    %cst_17 = arith.constant dense<0.000000e+00> : vector<4x256xf32>
    %37 = tpu.matmul %36, %33, %cst_17 {dimension_numbers = #tpu.dot_dimension_numbers<[1], [0], [0], [1], [0, 0, 1, 1], [], []>} : vector<4x32xf32>, vector<32x256xf32>, vector<4x256xf32> -> vector<4x256xf32>
    %38 = arith.addf %34, %37 : vector<4x256xf32>
    %c0_18 = arith.constant 0 : index
    %c0_19 = arith.constant 0 : index
    %39 = vector.load %arg10[%c0_18, %c0_19] : memref<4x256xf32, #tpu.memory_space<vmem>>, vector<4x256xf32>
    tpu.vector_store %arg10[%c0_18, %c0_19], %38 {strides = array<i32>} : memref<4x256xf32, #tpu.memory_space<vmem>>, vector<4x256xf32>,
    %c3_i32 = arith.constant 3 : i32
    %40 = arith.cmpi eq, %arg1, %c3_i32 : i32
    %41 = arith.extui %40 : i1 to i32
    %c0_i32_20 = arith.constant 0 : i32
    %42 = arith.cmpi ne, %41, %c0_i32_20 : i32
    scf.if %42 {
      %c0_21 = arith.constant 0 : index
      %c0_22 = arith.constant 0 : index
      %43 = vector.load %arg10[%c0_21, %c0_22] : memref<4x256xf32, #tpu.memory_space<vmem>>, vector<4x256xf32>
      %44 = arith.mulf %43, %43 : vector<4x256xf32>
      %cst_23 = arith.constant dense<0.000000e+00> : vector<256xf32>
      %45 = vector.multi_reduction <add>, %44, %cst_23 [0] : vector<4x256xf32> to vector<256xf32>
      %46 = vector.shape_cast %45 : vector<256xf32> to vector<1x256xf32>
      %47 = math.rsqrt %46 : vector<1x256xf32>
      %cst_24 = arith.constant 9.99999995E+11 : f32
      %48 = vector.broadcast %cst_24 : f32 to vector<1x256xf32>
      %49 = arith.minimumf %47, %48 : vector<1x256xf32>
      %50 = vector.broadcast %49 : vector<1x256xf32> to vector<4x256xf32>
      %51 = arith.mulf %43, %50 : vector<4x256xf32>
      %c0_25 = arith.constant 0 : index
      %c0_26 = arith.constant 0 : index
      %52 = vector.load %arg7[%c0_25, %c0_26] : memref<4x1xf32, #tpu.memory_space<vmem>>, vector<4x1xf32>
      %53 = vector.broadcast %52 : vector<4x1xf32> to vector<4x256xf32>
      %54 = arith.mulf %51, %53 : vector<4x256xf32>
      %c0_27 = arith.constant 0 : index
      %c0_28 = arith.constant 0 : index
      %c0_29 = arith.constant 0 : index
      %55 = vector.load %arg8[%c0_27, %c0_28, %c0_29] : memref<1x4x256xf32, #tpu.memory_space<vmem>>, vector<1x4x256xf32>
      %56 = vector.shape_cast %55 : vector<1x4x256xf32> to vector<4x256xf32>
      %57 = vector.shape_cast %54 : vector<4x256xf32> to vector<1x4x256xf32>
      tpu.vector_store %arg8[%c0_27, %c0_28, %c0_29], %57 {strides = array<i32>} : memref<1x4x256xf32, #tpu.memory_space<vmem>>, vector<1x4x256xf32>,
    } else {
    }
    return
  }
  func.func @transform_0(%arg0: i32, %arg1: i32) -> (i32, i32, i32) {
    %c0_i32 = arith.constant 0 : i32
    %c0_i32_0 = arith.constant 0 : i32
    %c0_i32_1 = arith.constant 0 : i32
    return %arg0, %c0_i32, %c0_i32_0 : i32, i32, i32
  }
  func.func @transform_1(%arg0: i32, %arg1: i32) -> (i32, i32) {
    %c0_i32 = arith.constant 0 : i32
    %c0_i32_0 = arith.constant 0 : i32
    %c0_i32_1 = arith.constant 0 : i32
    return %c0_i32, %c0_i32_0 : i32, i32
  }
  func.func @transform_2(%arg0: i32, %arg1: i32) -> (i32, i32, i32) {
    %c0_i32 = arith.constant 0 : i32
    %c0_i32_0 = arith.constant 0 : i32
    %c0_i32_1 = arith.constant 0 : i32
    return %arg1, %c0_i32, %c0_i32_0 : i32, i32, i32
  }
  func.func @transform_3(%arg0: i32, %arg1: i32) -> (i32, i32, i32) {
    %c0_i32 = arith.constant 0 : i32
    %c0_i32_0 = arith.constant 0 : i32
    %c0_i32_1 = arith.constant 0 : i32
    return %arg1, %c0_i32, %c0_i32_0 : i32, i32, i32
  }
  func.func @transform_4(%arg0: i32, %arg1: i32) -> (i32, i32) {
    %c0_i32 = arith.constant 0 : i32
    %c0_i32_0 = arith.constant 0 : i32
    %c0_i32_1 = arith.constant 0 : i32
    return %c0_i32, %c0_i32_0 : i32, i32
  }
  func.func @transform_5(%arg0: i32, %arg1: i32) -> (i32, i32) {
    %c0_i32 = arith.constant 0 : i32
    %c0_i32_0 = arith.constant 0 : i32
    %c0_i32_1 = arith.constant 0 : i32
    return %c0_i32, %c0_i32_0 : i32, i32
  }
  func.func @transform_6(%arg0: i32, %arg1: i32) -> (i32, i32, i32) {
    %c0_i32 = arith.constant 0 : i32
    %c0_i32_0 = arith.constant 0 : i32
    %c0_i32_1 = arith.constant 0 : i32
    return %arg0, %c0_i32, %c0_i32_0 : i32, i32, i32
  }
}

</mosaic_0001>

<llo_original>
// kernel: tpu_custom_call.1
$region0: #{tpu_custom_call.1}
  #allocation0 [shape = 'u32[]', space=smem, size = 0x4, offset = 0x4, fixed_abs, tag = 'smem constant byte address 0x4 - core index']
  #allocation1 [shape = 'u32[72,128]{1,0:T(1,128)}', space=vmem, size = 0x9000, scoped, tag = 'internal scratch']
  #allocation2 [shape = 'f32[4,256]{1,0:T(4,128)}', space=vmem, size = 0x1000, scoped, tag = 'scratch operand']
  #allocation3 [shape = 'f32[4,256]{1,0:T(4,128)}', space=vmem, size = 0x1000, scoped, tag = 'scratch operand']
  %s0 = inlined_call_operand.vmem [shape: f32[2,4,256], index: 0, kind: input, shape index: {}]
  %s1 = inlined_call_operand.vmem [shape: f32[4,1], index: 1, kind: input, shape index: {}]
  %s2 = inlined_call_operand.vmem [shape: f32[4,96,4], index: 2, kind: input, shape index: {}]
  %s3 = inlined_call_operand.vmem [shape: f32[4,4,32], index: 3, kind: input, shape index: {}]
  %s4 = inlined_call_operand.vmem [shape: f32[4,1], index: 4, kind: input, shape index: {}]
  %s5 = inlined_call_operand.vmem [shape: f32[4,1], index: 5, kind: input, shape index: {}]
  %s6 = inlined_call_operand.hbm [shape: f32[2,4,256], index: 6, kind: output, shape index: {}]
  %s7 = sld [smem:[#allocation0]]
  $region65: #{tpu_custom_call.1} parent=0
    _
  %s9 = ssub.s32 1, %s7
  %s10 = scalar_select 0, %s9, %s7
  $region1: #{tpu_custom_call.1} parent=0
    #allocation4 [shape = 'u8[8192]{0}', space=vmem, size = 0x2000, scoped, tag = 'output window, operand 0']
    #allocation5 [shape = 's32[2]{0}', space=sflag, size = 0x8, scoped, tag = 'scoped memory for tpu_custom_call.1']
    %11 = vsyncpa [#allocation5], 0
    %s12 = scalar_lea.sflag [#allocation5], 1
    %13 = vsyncpa %s12, 0
    loop: start=0, step=1, limit=10
    $region2: #{tpu_custom_call.1} parent=1 // loop_pre_header
      _
    $region3: #{tpu_custom_call.1} parent=1 // loop_header
      %s15 = sphi 0, %s19
      %p16 = scmp.ge.s32.totalorder %s15, 10
      %s22 = sphi 0, %s34
      %s23 = sphi 0, %s30
      %s24 = sphi 0, %s22
      %s25 = sphi 0, %s23
      %s26 = sphi 0, %s24
      %s27 = sphi 0, %s25
      %s37 = sphi 0, %s39
      %s40 = sphi 0, %s37
      %s41 = sphi 0, %s40
      %s57 = sphi 0, %s41
      %s61 = sphi 0, %s61
      %s63 = sphi 0, %s61
      %s64 = sphi 0, %s63
      %s78 = sphi 0, %s64
      %s84 = sphi 0, %s86
      %s87 = sphi 0, %s84
      %s88 = sphi 0, %s87
      %s104 = sphi 0, %s88
      %s110 = sphi 0, %s112
      %s113 = sphi 0, %s110
      %s114 = sphi 0, %s113
      %s130 = sphi 0, %s114
      %s134 = sphi 0, %s134
      %s136 = sphi 0, %s134
      %s137 = sphi 0, %s136
      %s151 = sphi 0, %s137
      %s155 = sphi 0, %s155
      %s157 = sphi 0, %s155
      %s158 = sphi 0, %s157
      %s172 = sphi 0, %s158
      %s178 = sphi 0, %s180
      %s181 = sphi 0, %s178
      %s182 = sphi 0, %s181
      %s198 = sphi 0, %s182
    $region4: #{tpu_custom_call.1} parent=1 // loop_header_branch
      %18 = sbr.rel (%p16) target = $region8
    $region5: #{tpu_custom_call.1} parent=1 // loop_body
      %s20 = ssub.s32 %s15, 1
      %s21 = ssub.s32 %s15, 2
      %s28 = sadd.s32 1, %s23
      %p29 = scmp.ge.s32.totalorder %s28, 4
      %s30 = scalar_select %p29, 0, %s28
      %s31 = sadd.s32 1, %s22
      %s32 = scalar_select %p29, %s31, %s22
      %p33 = scmp.ge.s32.totalorder %s32, 2
      %s34 = scalar_select %p33, 0, %s32
      %s35 = ssub.s32 %s22, %s34
      %p36 = scmp.eq.s32.totalorder %s35, 0
      %s38 = sadd.s32 %s37, 1
      %s39 = scalar_select %p36, %s37, %s38
      %p42 = pneg %p36
      %p43 = scmp.eq.s32.totalorder %s15, 7
      %p44 = por %p42, %p43
      %p45 = scmp.ne.s32.totalorder %s37, %s40
      %p46 = scmp.eq.s32.totalorder %s15, 0
      %p47 = por %p45, %p46
      %p48 = scmp.ne.s32.totalorder %s37, %s40
      %p49 = scmp.eq.s32.totalorder %s20, 7
      %p50 = por %p48, %p49
      %p51 = scmp.ne.s32.totalorder %s40, %s41
      %p52 = scmp.eq.s32.totalorder %s20, 0
      %p53 = por %p51, %p52
      %p54 = scmp.ne.s32.totalorder %s40, %s41
      %p55 = scmp.eq.s32.totalorder %s21, 7
      %p56 = por %p54, %p55
      %p58 = scmp.ne.s32.totalorder %s41, %s57
      %p59 = scmp.eq.s32.totalorder %s21, 0
      %p60 = por %p58, %p59
      %s62 = sadd.s32 %s61, 1
      %p65 = scmp.eq.s32.totalorder %s15, 7
      %p66 = scmp.ne.s32.totalorder %s61, %s63
      %p67 = scmp.eq.s32.totalorder %s15, 0
      %p68 = por %p66, %p67
      %p69 = scmp.ne.s32.totalorder %s61, %s63
      %p70 = scmp.eq.s32.totalorder %s20, 7
      %p71 = por %p69, %p70
      %p72 = scmp.ne.s32.totalorder %s63, %s64
      %p73 = scmp.eq.s32.totalorder %s20, 0
      %p74 = por %p72, %p73
      %p75 = scmp.ne.s32.totalorder %s63, %s64
      %p76 = scmp.eq.s32.totalorder %s21, 7
      %p77 = por %p75, %p76
      %p79 = scmp.ne.s32.totalorder %s64, %s78
      %p80 = scmp.eq.s32.totalorder %s21, 0
      %p81 = por %p79, %p80
      %s82 = ssub.s32 %s23, %s30
      %p83 = scmp.eq.s32.totalorder %s82, 0
      %s85 = sadd.s32 %s84, 1
      %s86 = scalar_select %p83, %s84, %s85
      %p89 = pneg %p83
      %p90 = scmp.eq.s32.totalorder %s15, 7
      %p91 = por %p89, %p90
      %p92 = scmp.ne.s32.totalorder %s84, %s87
      %p93 = scmp.eq.s32.totalorder %s15, 0
      %p94 = por %p92, %p93
      %p95 = scmp.ne.s32.totalorder %s84, %s87
      %p96 = scmp.eq.s32.totalorder %s20, 7
      %p97 = por %p95, %p96
      %p98 = scmp.ne.s32.totalorder %s87, %s88
      %p99 = scmp.eq.s32.totalorder %s20, 0
      %p100 = por %p98, %p99
      %p101 = scmp.ne.s32.totalorder %s87, %s88
      %p102 = scmp.eq.s32.totalorder %s21, 7
      %p103 = por %p101, %p102
      %p105 = scmp.ne.s32.totalorder %s88, %s104
      %p106 = scmp.eq.s32.totalorder %s21, 0
      %p107 = por %p105, %p106
      %s108 = ssub.s32 %s23, %s30
      %p109 = scmp.eq.s32.totalorder %s108, 0
      %s111 = sadd.s32 %s110, 1
      %s112 = scalar_select %p109, %s110, %s111
      %p115 = pneg %p109
      %p116 = scmp.eq.s32.totalorder %s15, 7
      %p117 = por %p115, %p116
      %p118 = scmp.ne.s32.totalorder %s110, %s113
      %p119 = scmp.eq.s32.totalorder %s15, 0
      %p120 = por %p118, %p119
      %p121 = scmp.ne.s32.totalorder %s110, %s113
      %p122 = scmp.eq.s32.totalorder %s20, 7
      %p123 = por %p121, %p122
      %p124 = scmp.ne.s32.totalorder %s113, %s114
      %p125 = scmp.eq.s32.totalorder %s20, 0
      %p126 = por %p124, %p125
      %p127 = scmp.ne.s32.totalorder %s113, %s114
      %p128 = scmp.eq.s32.totalorder %s21, 7
      %p129 = por %p127, %p128
      %p131 = scmp.ne.s32.totalorder %s114, %s130
      %p132 = scmp.eq.s32.totalorder %s21, 0
      %p133 = por %p131, %p132
      %s135 = sadd.s32 %s134, 1
      %p138 = scmp.eq.s32.totalorder %s15, 7
      %p139 = scmp.ne.s32.totalorder %s134, %s136
      %p140 = scmp.eq.s32.totalorder %s15, 0
      %p141 = por %p139, %p140
      %p142 = scmp.ne.s32.totalorder %s134, %s136
      %p143 = scmp.eq.s32.totalorder %s20, 7
      %p144 = por %p142, %p143
      %p145 = scmp.ne.s32.totalorder %s136, %s137
      %p146 = scmp.eq.s32.totalorder %s20, 0
      %p147 = por %p145, %p146
      %p148 = scmp.ne.s32.totalorder %s136, %s137
      %p149 = scmp.eq.s32.totalorder %s21, 7
      %p150 = por %p148, %p149
      %p152 = scmp.ne.s32.totalorder %s137, %s151
      %p153 = scmp.eq.s32.totalorder %s21, 0
      %p154 = por %p152, %p153
      %s156 = sadd.s32 %s155, 1
      %p159 = scmp.eq.s32.totalorder %s15, 7
      %p160 = scmp.ne.s32.totalorder %s155, %s157
      %p161 = scmp.eq.s32.totalorder %s15, 0
      %p162 = por %p160, %p161
      %p163 = scmp.ne.s32.totalorder %s155, %s157
      %p164 = scmp.eq.s32.totalorder %s20, 7
      %p165 = por %p163, %p164
      %p166 = scmp.ne.s32.totalorder %s157, %s158
      %p167 = scmp.eq.s32.totalorder %s20, 0
      %p168 = por %p166, %p167
      %p169 = scmp.ne.s32.totalorder %s157, %s158
      %p170 = scmp.eq.s32.totalorder %s21, 7
      %p171 = por %p169, %p170
      %p173 = scmp.ne.s32.totalorder %s158, %s172
      %p174 = scmp.eq.s32.totalorder %s21, 0
      %p175 = por %p173, %p174
      %s176 = ssub.s32 %s22, %s34
      %p177 = scmp.eq.s32.totalorder %s176, 0
      %s179 = sadd.s32 %s178, 1
      %s180 = scalar_select %p177, %s178, %s179
      %p183 = pneg %p177
      %p184 = scmp.eq.s32.totalorder %s15, 7
      %p185 = por %p183, %p184
      %p186 = scmp.ne.s32.totalorder %s178, %s181
      %p187 = scmp.eq.s32.totalorder %s15, 0
      %p188 = por %p186, %p187
      %p189 = scmp.ne.s32.totalorder %s178, %s181
      %p190 = scmp.eq.s32.totalorder %s20, 7
      %p191 = por %p189, %p190
      %p192 = scmp.ne.s32.totalorder %s181, %s182
      %p193 = scmp.eq.s32.totalorder %s20, 0
      %p194 = por %p192, %p193
      %p195 = scmp.ne.s32.totalorder %s181, %s182
      %p196 = scmp.eq.s32.totalorder %s21, 7
      %p197 = por %p195, %p196
      %p199 = scmp.ne.s32.totalorder %s182, %s198
      %p200 = scmp.eq.s32.totalorder %s21, 0
      %p201 = por %p199, %p200
      %p202 = scmp.le.s32.totalorder 1, %s15
      %p203 = scmp.lt.s32.totalorder %s15, 9
      %p204 = pnand %p202, %p203
      %p205 = pneg %p204
      // Predicated region
      $region9: #{tpu_custom_call.1} parent=5 // pred_check
        _
      $region10: #{tpu_custom_call.1} parent=5 // pred_check_branch
        %207 = sbr.rel (%p204) target = $region12
      $region11: #{tpu_custom_call.1} parent=5 // pred_region
        %s208 = ssub.s32 %s15, 1
        // Predicated region
        $region13: #{tpu_custom_call.1} parent=11 // pred_check
          %p209 = pneg %p74
        $region14: #{tpu_custom_call.1} parent=11 // pred_check_branch
          %211 = sbr.rel (%p209) target = $region16
        $region15: #{tpu_custom_call.1} parent=11 // pred_region
          _
        $region16: #{tpu_custom_call.1} parent=11 // pred_fallthru
          _
        // Predicated region
        $region17: #{tpu_custom_call.1} parent=11 // pred_check
          %p212 = pneg %p147
        $region18: #{tpu_custom_call.1} parent=11 // pred_check_branch
          %214 = sbr.rel (%p212) target = $region20
        $region19: #{tpu_custom_call.1} parent=11 // pred_region
          _
        $region20: #{tpu_custom_call.1} parent=11 // pred_fallthru
          _
        // Predicated region
        $region21: #{tpu_custom_call.1} parent=11 // pred_check
          %p215 = pneg %p168
        $region22: #{tpu_custom_call.1} parent=11 // pred_check_branch
          %217 = sbr.rel (%p215) target = $region24
        $region23: #{tpu_custom_call.1} parent=11 // pred_region
          _
        $region24: #{tpu_custom_call.1} parent=11 // pred_fallthru
          _
      $region12: #{tpu_custom_call.1} parent=5 // pred_fallthru
        _
      %p218 = scmp.lt.s32.totalorder %s15, 8
      // Predicated region
      $region25: #{tpu_custom_call.1} parent=5 // pred_check
        %p219 = pneg %p218
      $region26: #{tpu_custom_call.1} parent=5 // pred_check_branch
        %221 = sbr.rel (%p219) target = $region28
      $region27: #{tpu_custom_call.1} parent=5 // pred_region
        // Predicated region
        $region29: #{tpu_custom_call.1} parent=27 // pred_check
          %p222 = pneg %p47
        $region30: #{tpu_custom_call.1} parent=27 // pred_check_branch
          %224 = sbr.rel (%p222) target = $region32
        $region31: #{tpu_custom_call.1} parent=27 // pred_region
          %p225 = scmp.lt.s32.totalorder %s22, 1
          %s226 = scalar_select %p225, %s22, 1
          %s227 = smul.addr %s226, 2
          %s228 = smul.addr %s227, 4
          %s229 = scalar_lea.vmem %s0, %s228
        $region32: #{tpu_custom_call.1} parent=27 // pred_fallthru
          _
        // Predicated region
        $region33: #{tpu_custom_call.1} parent=27 // pred_check
          %p230 = pneg %p94
        $region34: #{tpu_custom_call.1} parent=27 // pred_check_branch
          %232 = sbr.rel (%p230) target = $region36
        $region35: #{tpu_custom_call.1} parent=27 // pred_region
          %p233 = scmp.lt.s32.totalorder %s23, 3
          %s234 = scalar_select %p233, %s23, 3
          %s235 = smul.addr %s234, 12
          %s236 = smul.addr %s235, 8
          %s237 = scalar_lea.vmem %s2, %s236
        $region36: #{tpu_custom_call.1} parent=27 // pred_fallthru
          _
        // Predicated region
        $region37: #{tpu_custom_call.1} parent=27 // pred_check
          %p238 = pneg %p120
        $region38: #{tpu_custom_call.1} parent=27 // pred_check_branch
          %240 = sbr.rel (%p238) target = $region40
        $region39: #{tpu_custom_call.1} parent=27 // pred_region
          %p241 = scmp.lt.s32.totalorder %s23, 3
          %s242 = scalar_select %p241, %s23, 3
          %s243 = smul.addr %s242, 4
          %s244 = scalar_lea.vmem %s3, %s243
        $region40: #{tpu_custom_call.1} parent=27 // pred_fallthru
          _
      $region28: #{tpu_custom_call.1} parent=5 // pred_fallthru
        _
      %p245 = scmp.le.s32.totalorder 1, %s15
      %p246 = scmp.lt.s32.totalorder %s15, 9
      %p247 = pnand %p245, %p246
      %p248 = pneg %p247
      // Predicated region
      $region41: #{tpu_custom_call.1} parent=5 // pred_check
        _
      $region42: #{tpu_custom_call.1} parent=5 // pred_check_branch
        %250 = sbr.rel (%p247) target = $region44
      $region43: #{tpu_custom_call.1} parent=5 // pred_region
        %s251 = ssub.s32 %s15, 1
        %p252 = scmp.lt.s32.totalorder %s24, 1
        %s253 = scalar_select %p252, %s24, 1
        %s254 = smul.addr %s253, 2
        %s255 = smul.addr %s254, 4
        %s256 = scalar_lea.vmem %s0, %s255
        %p257 = pneg %p53
        %p258 = pneg %p50
        %p259 = pneg %p74
        %p260 = pneg %p71
        %p261 = scmp.lt.s32.totalorder %s25, 3
        %s262 = scalar_select %p261, %s25, 3
        %s263 = smul.addr %s262, 12
        %s264 = smul.addr %s263, 8
        %s265 = scalar_lea.vmem %s2, %s264
        %p266 = pneg %p100
        %p267 = pneg %p97
        %p268 = scmp.lt.s32.totalorder %s25, 3
        %s269 = scalar_select %p268, %s25, 3
        %s270 = smul.addr %s269, 4
        %s271 = scalar_lea.vmem %s3, %s270
        %p272 = pneg %p126
        %p273 = pneg %p123
        %p274 = pneg %p147
        %p275 = pneg %p144
        %p276 = pneg %p168
        %p277 = pneg %p165
        %p278 = pneg %p194
        %p279 = pneg %p191
        %s280 = sand.u32 %s181, 1
        %s281 = scalar_lea.sflag [#allocation5], %s280
        %s282 = sand.u32 %s181, 1
        %s283 = smul.addr %s282, 8
        %s284 = scalar_lea.vmem [#allocation4], %s283
        %p285 = scmp.lt.s32.totalorder %s24, 1
        %s286 = scalar_select %p285, %s24, 1
        %s287 = smul.addr %s286, 2
        %s288 = smul.addr %s287, 4
        %s289 = scalar_lea.vmem %s0, %s288
        %p290 = scmp.lt.s32.totalorder %s25, 3
        %s291 = scalar_select %p290, %s25, 3
        %s292 = smul.addr %s291, 12
        %s293 = smul.addr %s292, 8
        %s294 = scalar_lea.vmem %s2, %s293
        %p295 = scmp.lt.s32.totalorder %s25, 3
        %s296 = scalar_select %p295, %s25, 3
        %s297 = smul.addr %s296, 4
        %s298 = scalar_lea.vmem %s3, %s297
        %p299 = scmp.eq.s32.totalorder %s25, 0
        // Predicated region
        $region45: #{tpu_custom_call.1} parent=43 // pred_check
          %p300 = pneg %p299
        $region46: #{tpu_custom_call.1} parent=43 // pred_check_branch
          %302 = sbr.rel (%p300) target = $region48
        $region47: #{tpu_custom_call.1} parent=43 // pred_region
          %v303 = vld [vmem:[%s289] sm:$0xff]
          %v304 = vmul.f32 %v303, %v303
          %306 = vst [vmem:[#allocation1] ss:$2 sm:$0xff] %v304
          %v307 = vld.sshfl [vmem:[#allocation1] sm:$0xff pattern:$0x75316420]
          %v308 = vld.sshfl [vmem:[#allocation1 + $0x8] sm:$0xff pattern:$0x75316420]
          %vm311 = vcmask 1043456
          %v312 = vsel %vm311, %v307, 0.0
          %v313 = vrot.slane %v312, 4
          %v314 = vadd.f32 %v312, %v313
          %v315 = vrot.slane %v314, 2
          %v316 = vadd.f32 %v314, %v315
          %v317 = vrot.slane %v316, 1
          %v318 = vadd.f32 %v316, %v317
          %v319 = vsel %vm311, %v308, 0.0
          %v320 = vrot.slane %v319, 4
          %v321 = vadd.f32 %v319, %v320
          %v322 = vrot.slane %v321, 2
          %v323 = vadd.f32 %v321, %v322
          %v324 = vrot.slane %v323, 1
          %v325 = vadd.f32 %v323, %v324
          %v326 = vrsqrt.pop %v318
          %v327 = vmul.f32 %v326, %v318
          %v328 = vmul.f32 %v327, %v326
          %v329 = vmul.f32 0.5, %v328
          %v330 = vsub.f32 1.5, %v329
          %v331 = vmul.f32 %v326, %v330
          %vm332 = vweird.f32 %v318
          %vm333 = vweird.f32 %v326
          %vm334 = vmor %vm332, %vm333
          %v335 = vsel %vm334, %v326, %v331
          %v336 = vrsqrt.pop %v325
          %v337 = vmul.f32 %v336, %v325
          %v338 = vmul.f32 %v337, %v336
          %v339 = vmul.f32 0.5, %v338
          %v340 = vsub.f32 1.5, %v339
          %v341 = vmul.f32 %v336, %v340
          %vm342 = vweird.f32 %v325
          %vm343 = vweird.f32 %v336
          %vm344 = vmor %vm342, %vm343
          %v345 = vsel %vm344, %v336, %v341
          %v346 = vmin.f32 %v335, 1e+12
          %v347 = vmin.f32 %v345, 1e+12
          %v350 = vrot.slane %v347, 4
          %v351 = vsel %vm311, %v346, %v350
          %v353 = vmul.f32 %v303, %v351
          %v354 = vld [vmem:[%s1] sm:$0xf]
          %356 = vset.pattern.permute.xlu0 0
          %357 = vperm.xlu0 %356, %v354
          %v358 = vpop.permute.xlu0 %357
          %v360 = vunpack.c.l.s4 839922192
          %v361 = vunpack.c.0.s8 %v360
          %v362 = vperm.slane %v358, %v361
          %v364 = vmul.f32 %v353, %v362
          %365 = vst [vmem:[#allocation2] sm:$0xff] %v364
          %v366 = vld [vmem:[%s4] sm:$0xf]
          %368 = vset.pattern.permute.xlu0 0
          %369 = vperm.xlu0 %368, %v366
          %v370 = vpop.permute.xlu0 %369
          %v372 = vunpack.c.l.s4 839922192
          %v373 = vunpack.c.0.s8 %v372
          %v374 = vperm.slane %v370, %v373
          %376 = vst [vmem:[#allocation3] sm:$0xff] %v374
        $region48: #{tpu_custom_call.1} parent=43 // pred_fallthru
          _
        %v377 = vld [vmem:[#allocation2] sm:$0xff]
        %v378 = vld [vmem:[%s294] sm:$0xff]
        %v379 = vld [vmem:[%s294 + $0x8] sm:$0xff]
        %v380 = vld [vmem:[%s294 + $0x10] sm:$0xff]
        %v381 = vld [vmem:[%s294 + $0x18] sm:$0xff]
        %v382 = vld [vmem:[%s294 + $0x20] sm:$0xff]
        %v383 = vld [vmem:[%s294 + $0x28] sm:$0xff]
        %v384 = vld [vmem:[%s294 + $0x30] sm:$0xff]
        %v385 = vld [vmem:[%s294 + $0x38] sm:$0xff]
        %v386 = vld [vmem:[%s294 + $0x40] sm:$0xff]
        %v387 = vld [vmem:[%s294 + $0x48] sm:$0xff]
        %v388 = vld [vmem:[%s294 + $0x50] sm:$0xff]
        %v389 = vld [vmem:[%s294 + $0x58] sm:$0xff]
        %391 = vst [vmem:[#allocation1] ss:$2 sm:$0xff] %v377
        %v392 = vld.sshfl [vmem:[#allocation1] sm:$0xff pattern:$0x75316420]
        %v393 = vld.sshfl [vmem:[#allocation1 + $0x8] sm:$0xff pattern:$0x75316420]
        %vm394 = vcmask 31744
        %v396 = vsel %vm394, %v378, 0
        %v399 = vsel %vm394, %v379, 0
        %v402 = vsel %vm394, %v380, 0
        %v405 = vsel %vm394, %v381, 0
        %v408 = vsel %vm394, %v382, 0
        %v411 = vsel %vm394, %v383, 0
        %v414 = vsel %vm394, %v384, 0
        %v417 = vsel %vm394, %v385, 0
        %v420 = vsel %vm394, %v386, 0
        %v423 = vsel %vm394, %v387, 0
        %v426 = vsel %vm394, %v388, 0
        %v429 = vsel %vm394, %v389, 0
        %vm431 = vcmask 1043456
        %v432 = vsel %vm431, %v392, 0
        %v434 = vsel %vm431, %v393, 0
        %436 = vmatpush.msra.mxu0 0.0
        %437 = vmatpush.msra.mxu0 0.0
        %438 = vmatpush.msra.mxu0 0.0
        %439 = vmatpush.msra.mxu0 0.0
        %440 = vmatpush.msra.mxu0 0.0
        %441 = vmatpush.msra.mxu0 0.0
        %442 = vmatpush.msra.mxu0 0.0
        %443 = vmatpush.msra.mxu0 0.0
        %444 = vmatpush.msra.mxu0 0.0
        %445 = vmatpush.msra.mxu0 0.0
        %446 = vmatpush.msra.mxu0 0.0
        %447 = vmatpush.msra.mxu0 0.0
        %448 = vmatpush.msra.mxu0 0.0
        %449 = vmatpush.msra.mxu0 0.0
        %450 = vmatpush.msra.mxu0 0.0
        %451 = vmatpush.msra.mxu0 %v432
        %452 = vmatmul.f32.gmra.mxu0 %v396
        %v453 = vpop.f32.mrf.mxu0
        %v454 = vadd.f32 0.0, %v453
        %455 = vmatmul.f32.gmra.mxu0 %v399
        %v456 = vpop.f32.mrf.mxu0
        %v457 = vadd.f32 0.0, %v456
        %458 = vmatmul.f32.gmra.mxu0 %v402
        %v459 = vpop.f32.mrf.mxu0
        %v460 = vadd.f32 0.0, %v459
        %461 = vmatmul.f32.gmra.mxu0 %v405
        %v462 = vpop.f32.mrf.mxu0
        %v463 = vadd.f32 0.0, %v462
        %464 = vmatmul.f32.gmra.mxu0 %v408
        %v465 = vpop.f32.mrf.mxu0
        %v466 = vadd.f32 0.0, %v465
        %467 = vmatmul.f32.gmra.mxu0 %v411
        %v468 = vpop.f32.mrf.mxu0
        %v469 = vadd.f32 0.0, %v468
        %470 = vmatmul.f32.gmra.mxu0 %v414
        %v471 = vpop.f32.mrf.mxu0
        %v472 = vadd.f32 0.0, %v471
        %473 = vmatmul.f32.gmra.mxu0 %v417
        %v474 = vpop.f32.mrf.mxu0
        %v475 = vadd.f32 0.0, %v474
        %476 = vmatmul.f32.gmra.mxu0 %v420
        %v477 = vpop.f32.mrf.mxu0
        %v478 = vadd.f32 0.0, %v477
        %479 = vmatmul.f32.gmra.mxu0 %v423
        %v480 = vpop.f32.mrf.mxu0
        %v481 = vadd.f32 0.0, %v480
        %482 = vmatmul.f32.gmra.mxu0 %v426
        %v483 = vpop.f32.mrf.mxu0
        %v484 = vadd.f32 0.0, %v483
        %485 = vmatmul.f32.gmra.mxu0 %v429
        %v486 = vpop.f32.mrf.mxu0
        %v487 = vadd.f32 0.0, %v486
        %488 = vdwg.mxu0
        %489 = vmatpush.msra.mxu0 0.0
        %490 = vmatpush.msra.mxu0 0.0
        %491 = vmatpush.msra.mxu0 0.0
        %492 = vmatpush.msra.mxu0 0.0
        %493 = vmatpush.msra.mxu0 0.0
        %494 = vmatpush.msra.mxu0 0.0
        %495 = vmatpush.msra.mxu0 0.0
        %496 = vmatpush.msra.mxu0 0.0
        %497 = vmatpush.msra.mxu0 0.0
        %498 = vmatpush.msra.mxu0 0.0
        %499 = vmatpush.msra.mxu0 0.0
        %500 = vmatpush.msra.mxu0 0.0
        %501 = vmatpush.msra.mxu0 0.0
        %502 = vmatpush.msra.mxu0 0.0
        %503 = vmatpush.msra.mxu0 0.0
        %504 = vmatpush.msra.mxu0 %v434
        %505 = vmatmul.f32.gmra.mxu0 %v396
        %v506 = vpop.f32.mrf.mxu0
        %v507 = vadd.f32 0.0, %v506
        %508 = vmatmul.f32.gmra.mxu0 %v399
        %v509 = vpop.f32.mrf.mxu0
        %v510 = vadd.f32 0.0, %v509
        %511 = vmatmul.f32.gmra.mxu0 %v402
        %v512 = vpop.f32.mrf.mxu0
        %v513 = vadd.f32 0.0, %v512
        %514 = vmatmul.f32.gmra.mxu0 %v405
        %v515 = vpop.f32.mrf.mxu0
        %v516 = vadd.f32 0.0, %v515
        %517 = vmatmul.f32.gmra.mxu0 %v408
        %v518 = vpop.f32.mrf.mxu0
        %v519 = vadd.f32 0.0, %v518
        %520 = vmatmul.f32.gmra.mxu0 %v411
        %v521 = vpop.f32.mrf.mxu0
        %v522 = vadd.f32 0.0, %v521
        %523 = vmatmul.f32.gmra.mxu0 %v414
        %v524 = vpop.f32.mrf.mxu0
        %v525 = vadd.f32 0.0, %v524
        %526 = vmatmul.f32.gmra.mxu0 %v417
        %v527 = vpop.f32.mrf.mxu0
        %v528 = vadd.f32 0.0, %v527
        %529 = vmatmul.f32.gmra.mxu0 %v420
        %v530 = vpop.f32.mrf.mxu0
        %v531 = vadd.f32 0.0, %v530
        %532 = vmatmul.f32.gmra.mxu0 %v423
        %v533 = vpop.f32.mrf.mxu0
        %v534 = vadd.f32 0.0, %v533
        %535 = vmatmul.f32.gmra.mxu0 %v426
        %v536 = vpop.f32.mrf.mxu0
        %v537 = vadd.f32 0.0, %v536
        %538 = vmatmul.f32.gmra.mxu0 %v429
        %v539 = vpop.f32.mrf.mxu0
        %v540 = vadd.f32 0.0, %v539
        %541 = vdwg.mxu0
        %v542 = vmax.f32 %v454, %v460
        %v543 = vmax.f32 %v457, %v463
        %v544 = vmax.f32 %v542, %v543
        %v545 = vrot.slane %v544, 4
        %v546 = vmax.f32 %v544, %v545
        %v547 = vrot.slane %v546, 2
        %v548 = vmax.f32 %v546, %v547
        %v549 = vrot.slane %v548, 1
        %v550 = vmax.f32 %v548, %v549
        %v551 = vmax.f32 %v507, %v513
        %v552 = vmax.f32 %v510, %v516
        %v553 = vmax.f32 %v551, %v552
        %v554 = vrot.slane %v553, 4
        %v555 = vmax.f32 %v553, %v554
        %v556 = vrot.slane %v555, 2
        %v557 = vmax.f32 %v555, %v556
        %v558 = vrot.slane %v557, 1
        %v559 = vmax.f32 %v557, %v558
        %v560 = vsub.f32 %v454, %v550
        %v561 = vsub.f32 %v507, %v559
        %v562 = vsub.f32 %v457, %v550
        %v563 = vsub.f32 %v510, %v559
        %v564 = vsub.f32 %v460, %v550
        %v565 = vsub.f32 %v513, %v559
        %v566 = vsub.f32 %v463, %v550
        %v567 = vsub.f32 %v516, %v559
        %v568 = vmul.f32 %v560, 1.442695
        %v569 = vpow.pop %v568
        %v570 = vmul.f32 %v561, 1.442695
        %v571 = vpow.pop %v570
        %v572 = vmul.f32 %v562, 1.442695
        %v573 = vpow.pop %v572
        %v574 = vmul.f32 %v563, 1.442695
        %v575 = vpow.pop %v574
        %v576 = vmul.f32 %v564, 1.442695
        %v577 = vpow.pop %v576
        %v578 = vmul.f32 %v565, 1.442695
        %v579 = vpow.pop %v578
        %v580 = vmul.f32 %v566, 1.442695
        %v581 = vpow.pop %v580
        %v582 = vmul.f32 %v567, 1.442695
        %v583 = vpow.pop %v582
        %v584 = vadd.f32 %v569, %v573
        %v585 = vadd.f32 %v584, %v577
        %v586 = vadd.f32 %v585, %v581
        %v587 = vrot.slane %v586, 4
        %v588 = vadd.f32 %v586, %v587
        %v589 = vrot.slane %v588, 2
        %v590 = vadd.f32 %v588, %v589
        %v591 = vrot.slane %v590, 1
        %v592 = vadd.f32 %v590, %v591
        %v593 = vadd.f32 %v571, %v575
        %v594 = vadd.f32 %v593, %v579
        %v595 = vadd.f32 %v594, %v583
        %v596 = vrot.slane %v595, 4
        %v597 = vadd.f32 %v595, %v596
        %v598 = vrot.slane %v597, 2
        %v599 = vadd.f32 %v597, %v598
        %v600 = vrot.slane %v599, 1
        %v601 = vadd.f32 %v599, %v600
        %v602 = vrcp.pop %v592
        %v603 = vmul.f32 %v592, %v602
        %v604 = vsub.f32 1.0, %v603
        %v605 = vmul.f32 %v602, %v604
        %v606 = vadd.f32 %v602, %v605
        %vm607 = vweird.f32 %v592
        %vm608 = vweird.f32 %v602
        %vm609 = vmor %vm607, %vm608
        %v610 = vsel %vm609, %v602, %v606
        %v611 = vand.u32 2147483647, %v592
        %vm612 = vcmp.eq.f32.partialorder %v611, 8.507059e+37
        %v613 = vand.u32 %v592, 2147483648
        %v614 = vor.u32 1.1754944e-38, %v613
        %v615 = vsel %vm612, %v614, %v610
        %v616 = vrcp.pop %v601
        %v617 = vmul.f32 %v601, %v616
        %v618 = vsub.f32 1.0, %v617
        %v619 = vmul.f32 %v616, %v618
        %v620 = vadd.f32 %v616, %v619
        %vm621 = vweird.f32 %v601
        %vm622 = vweird.f32 %v616
        %vm623 = vmor %vm621, %vm622
        %v624 = vsel %vm623, %v616, %v620
        %v625 = vand.u32 2147483647, %v601
        %vm626 = vcmp.eq.f32.partialorder %v625, 8.507059e+37
        %v627 = vand.u32 %v601, 2147483648
        %v628 = vor.u32 1.1754944e-38, %v627
        %v629 = vsel %vm626, %v628, %v624
        %v630 = vmul.f32 %v615, 0.17677669
        %v631 = vmul.f32 %v629, 0.17677669
        %v632 = vmul.f32 %v569, %v630
        %v633 = vmul.f32 %v571, %v631
        %v634 = vmul.f32 %v573, %v630
        %v635 = vmul.f32 %v575, %v631
        %v636 = vmul.f32 %v577, %v630
        %v637 = vmul.f32 %v579, %v631
        %v638 = vmul.f32 %v581, %v630
        %v639 = vmul.f32 %v583, %v631
        %v640 = vmax.f32 %v466, %v519
        %641 = vmax.xlane.f32.xlu0 %v640
        %v642 = vpop.xlane.xlu0 %641
        %v643 = vmax.f32 %v469, %v522
        %644 = vmax.xlane.f32.xlu0 %v643
        %v645 = vpop.xlane.xlu0 %644
        %v646 = vmax.f32 %v472, %v525
        %647 = vmax.xlane.f32.xlu0 %v646
        %v648 = vpop.xlane.xlu0 %647
        %v649 = vmax.f32 %v475, %v528
        %650 = vmax.xlane.f32.xlu0 %v649
        %v651 = vpop.xlane.xlu0 %650
        %v652 = vsub.f32 %v466, %v642
        %v653 = vsub.f32 %v519, %v642
        %v654 = vsub.f32 %v469, %v645
        %v655 = vsub.f32 %v522, %v645
        %v656 = vsub.f32 %v472, %v648
        %v657 = vsub.f32 %v525, %v648
        %v658 = vsub.f32 %v475, %v651
        %v659 = vsub.f32 %v528, %v651
        %v660 = vmul.f32 %v652, 1.442695
        %v661 = vpow.pop %v660
        %v662 = vmul.f32 %v653, 1.442695
        %v663 = vpow.pop %v662
        %v664 = vmul.f32 %v654, 1.442695
        %v665 = vpow.pop %v664
        %v666 = vmul.f32 %v655, 1.442695
        %v667 = vpow.pop %v666
        %v668 = vmul.f32 %v656, 1.442695
        %v669 = vpow.pop %v668
        %v670 = vmul.f32 %v657, 1.442695
        %v671 = vpow.pop %v670
        %v672 = vmul.f32 %v658, 1.442695
        %v673 = vpow.pop %v672
        %v674 = vmul.f32 %v659, 1.442695
        %v675 = vpow.pop %v674
        %v676 = vadd.f32 %v661, %v663
        %677 = vadd.xlane.f32.xlu0 %v676
        %v678 = vpop.xlane.xlu0 %677
        %v679 = vadd.f32 %v665, %v667
        %680 = vadd.xlane.f32.xlu0 %v679
        %v681 = vpop.xlane.xlu0 %680
        %v682 = vadd.f32 %v669, %v671
        %683 = vadd.xlane.f32.xlu0 %v682
        %v684 = vpop.xlane.xlu0 %683
        %v685 = vadd.f32 %v673, %v675
        %686 = vadd.xlane.f32.xlu0 %v685
        %v687 = vpop.xlane.xlu0 %686
        %v688 = vrcp.pop %v678
        %v689 = vmul.f32 %v678, %v688
        %v690 = vsub.f32 1.0, %v689
        %v691 = vmul.f32 %v688, %v690
        %v692 = vadd.f32 %v688, %v691
        %vm693 = vweird.f32 %v678
        %vm694 = vweird.f32 %v688
        %vm695 = vmor %vm693, %vm694
        %v696 = vsel %vm695, %v688, %v692
        %v697 = vand.u32 2147483647, %v678
        %vm698 = vcmp.eq.f32.partialorder %v697, 8.507059e+37
        %v699 = vand.u32 %v678, 2147483648
        %v700 = vor.u32 1.1754944e-38, %v699
        %v701 = vsel %vm698, %v700, %v696
        %v702 = vrcp.pop %v681
        %v703 = vmul.f32 %v681, %v702
        %v704 = vsub.f32 1.0, %v703
        %v705 = vmul.f32 %v702, %v704
        %v706 = vadd.f32 %v702, %v705
        %vm707 = vweird.f32 %v681
        %vm708 = vweird.f32 %v702
        %vm709 = vmor %vm707, %vm708
        %v710 = vsel %vm709, %v702, %v706
        %v711 = vand.u32 2147483647, %v681
        %vm712 = vcmp.eq.f32.partialorder %v711, 8.507059e+37
        %v713 = vand.u32 %v681, 2147483648
        %v714 = vor.u32 1.1754944e-38, %v713
        %v715 = vsel %vm712, %v714, %v710
        %v716 = vrcp.pop %v684
        %v717 = vmul.f32 %v684, %v716
        %v718 = vsub.f32 1.0, %v717
        %v719 = vmul.f32 %v716, %v718
        %v720 = vadd.f32 %v716, %v719
        %vm721 = vweird.f32 %v684
        %vm722 = vweird.f32 %v716
        %vm723 = vmor %vm721, %vm722
        %v724 = vsel %vm723, %v716, %v720
        %v725 = vand.u32 2147483647, %v684
        %vm726 = vcmp.eq.f32.partialorder %v725, 8.507059e+37
        %v727 = vand.u32 %v684, 2147483648
        %v728 = vor.u32 1.1754944e-38, %v727
        %v729 = vsel %vm726, %v728, %v724
        %v730 = vrcp.pop %v687
        %v731 = vmul.f32 %v687, %v730
        %v732 = vsub.f32 1.0, %v731
        %v733 = vmul.f32 %v730, %v732
        %v734 = vadd.f32 %v730, %v733
        %vm735 = vweird.f32 %v687
        %vm736 = vweird.f32 %v730
        %vm737 = vmor %vm735, %vm736
        %v738 = vsel %vm737, %v730, %v734
        %v739 = vand.u32 2147483647, %v687
        %vm740 = vcmp.eq.f32.partialorder %v739, 8.507059e+37
        %v741 = vand.u32 %v687, 2147483648
        %v742 = vor.u32 1.1754944e-38, %v741
        %v743 = vsel %vm740, %v742, %v738
        %v744 = vmul.f32 %v661, %v701
        %v745 = vmul.f32 %v663, %v701
        %v746 = vmul.f32 %v665, %v715
        %v747 = vmul.f32 %v667, %v715
        %v748 = vmul.f32 %v669, %v729
        %v749 = vmul.f32 %v671, %v729
        %v750 = vmul.f32 %v673, %v743
        %v751 = vmul.f32 %v675, %v743
        %752 = vmatpush.xpose.msra.mxu0 0.0
        %753 = vmatpush.xpose.msra.mxu0 0.0
        %754 = vmatpush.xpose.msra.mxu0 0.0
        %755 = vmatpush.xpose.msra.mxu0 0.0
        %756 = vmatpush.xpose.msra.mxu0 0.0
        %757 = vmatpush.xpose.msra.mxu0 0.0
        %758 = vmatpush.xpose.msra.mxu0 0.0
        %759 = vmatpush.xpose.msra.mxu0 0.0
        %760 = vmatpush.xpose.msra.mxu0 0.0
        %761 = vmatpush.xpose.msra.mxu0 0.0
        %762 = vmatpush.xpose.msra.mxu0 0.0
        %763 = vmatpush.xpose.msra.mxu0 0.0
        %764 = vmatpush.xpose.msra.mxu0 %v750
        %765 = vmatpush.xpose.msra.mxu0 %v748
        %766 = vmatpush.xpose.msra.mxu0 %v746
        %767 = vmatpush.xpose.msra.mxu0 %v744
        %768 = vmatmul.f32.gmra.mxu0 %v478
        %v769 = vpop.f32.mrf.mxu0
        %v770 = vadd.f32 0.0, %v769
        %771 = vmatmul.f32.gmra.mxu0 %v481
        %v772 = vpop.f32.mrf.mxu0
        %v773 = vadd.f32 0.0, %v772
        %774 = vmatmul.f32.gmra.mxu0 %v484
        %v775 = vpop.f32.mrf.mxu0
        %v776 = vadd.f32 0.0, %v775
        %777 = vmatmul.f32.gmra.mxu0 %v487
        %v778 = vpop.f32.mrf.mxu0
        %v779 = vadd.f32 0.0, %v778
        %780 = vdwg.mxu0
        %781 = vmatpush.xpose.msra.mxu0 0.0
        %782 = vmatpush.xpose.msra.mxu0 0.0
        %783 = vmatpush.xpose.msra.mxu0 0.0
        %784 = vmatpush.xpose.msra.mxu0 0.0
        %785 = vmatpush.xpose.msra.mxu0 0.0
        %786 = vmatpush.xpose.msra.mxu0 0.0
        %787 = vmatpush.xpose.msra.mxu0 0.0
        %788 = vmatpush.xpose.msra.mxu0 0.0
        %789 = vmatpush.xpose.msra.mxu0 0.0
        %790 = vmatpush.xpose.msra.mxu0 0.0
        %791 = vmatpush.xpose.msra.mxu0 0.0
        %792 = vmatpush.xpose.msra.mxu0 0.0
        %793 = vmatpush.xpose.msra.mxu0 %v751
        %794 = vmatpush.xpose.msra.mxu0 %v749
        %795 = vmatpush.xpose.msra.mxu0 %v747
        %796 = vmatpush.xpose.msra.mxu0 %v745
        %797 = vmatmul.f32.gmra.mxu0 %v531
        %v798 = vpop.f32.mrf.mxu0
        %v799 = vadd.f32 %v770, %v798
        %800 = vmatmul.f32.gmra.mxu0 %v534
        %v801 = vpop.f32.mrf.mxu0
        %v802 = vadd.f32 %v773, %v801
        %803 = vmatmul.f32.gmra.mxu0 %v537
        %v804 = vpop.f32.mrf.mxu0
        %v805 = vadd.f32 %v776, %v804
        %806 = vmatmul.f32.gmra.mxu0 %v540
        %v807 = vpop.f32.mrf.mxu0
        %v808 = vadd.f32 %v779, %v807
        %809 = vdwg.mxu0
        %vm810 = vcmask 261120
        %v812 = vsel %vm810, %v799, 0
        %v815 = vsel %vm810, %v802, 0
        %v818 = vsel %vm810, %v805, 0
        %v821 = vsel %vm810, %v808, 0
        %823 = vmatpush.msra.mxu0 0.0
        %824 = vmatpush.msra.mxu0 0.0
        %825 = vmatpush.msra.mxu0 0.0
        %826 = vmatpush.msra.mxu0 0.0
        %827 = vmatpush.msra.mxu0 0.0
        %828 = vmatpush.msra.mxu0 0.0
        %829 = vmatpush.msra.mxu0 0.0
        %830 = vmatpush.msra.mxu0 0.0
        %831 = vmatpush.msra.mxu0 0.0
        %832 = vmatpush.msra.mxu0 0.0
        %833 = vmatpush.msra.mxu0 0.0
        %834 = vmatpush.msra.mxu0 0.0
        %835 = vmatpush.msra.mxu0 %v638
        %836 = vmatpush.msra.mxu0 %v636
        %837 = vmatpush.msra.mxu0 %v634
        %838 = vmatpush.msra.mxu0 %v632
        %839 = vmatmul.f32.gmra.mxu0 %v812
        %v840 = vpop.f32.mrf.mxu0
        %v841 = vadd.f32 0.0, %v840
        %842 = vmatmul.f32.gmra.mxu0 %v815
        %v843 = vpop.f32.mrf.mxu0
        %v844 = vadd.f32 0.0, %v843
        %845 = vmatmul.f32.gmra.mxu0 %v818
        %v846 = vpop.f32.mrf.mxu0
        %v847 = vadd.f32 0.0, %v846
        %848 = vmatmul.f32.gmra.mxu0 %v821
        %v849 = vpop.f32.mrf.mxu0
        %v850 = vadd.f32 0.0, %v849
        %851 = vdwg.mxu0
        %852 = vmatpush.msra.mxu0 0.0
        %853 = vmatpush.msra.mxu0 0.0
        %854 = vmatpush.msra.mxu0 0.0
        %855 = vmatpush.msra.mxu0 0.0
        %856 = vmatpush.msra.mxu0 0.0
        %857 = vmatpush.msra.mxu0 0.0
        %858 = vmatpush.msra.mxu0 0.0
        %859 = vmatpush.msra.mxu0 0.0
        %860 = vmatpush.msra.mxu0 0.0
        %861 = vmatpush.msra.mxu0 0.0
        %862 = vmatpush.msra.mxu0 0.0
        %863 = vmatpush.msra.mxu0 0.0
        %864 = vmatpush.msra.mxu0 %v639
        %865 = vmatpush.msra.mxu0 %v637
        %866 = vmatpush.msra.mxu0 %v635
        %867 = vmatpush.msra.mxu0 %v633
        %868 = vmatmul.f32.gmra.mxu0 %v812
        %v869 = vpop.f32.mrf.mxu0
        %v870 = vadd.f32 0.0, %v869
        %871 = vmatmul.f32.gmra.mxu0 %v815
        %v872 = vpop.f32.mrf.mxu0
        %v873 = vadd.f32 0.0, %v872
        %874 = vmatmul.f32.gmra.mxu0 %v818
        %v875 = vpop.f32.mrf.mxu0
        %v876 = vadd.f32 0.0, %v875
        %877 = vmatmul.f32.gmra.mxu0 %v821
        %v878 = vpop.f32.mrf.mxu0
        %v879 = vadd.f32 0.0, %v878
        %880 = vdwg.mxu0
        %v881 = vld [vmem:[#allocation3] sm:$0xff]
        %v882 = vld [vmem:[%s298] sm:$0xf]
        %v884 = vsel %vm810, %v882, 0
        %886 = vmatpush.msra.mxu0 0.0
        %887 = vmatpush.msra.mxu0 0.0
        %888 = vmatpush.msra.mxu0 0.0
        %889 = vmatpush.msra.mxu0 0.0
        %890 = vmatpush.msra.mxu0 0.0
        %891 = vmatpush.msra.mxu0 0.0
        %892 = vmatpush.msra.mxu0 0.0
        %893 = vmatpush.msra.mxu0 0.0
        %894 = vmatpush.msra.mxu0 0.0
        %895 = vmatpush.msra.mxu0 0.0
        %896 = vmatpush.msra.mxu0 0.0
        %897 = vmatpush.msra.mxu0 0.0
        %898 = vmatpush.msra.mxu0 %v850
        %899 = vmatpush.msra.mxu0 %v847
        %900 = vmatpush.msra.mxu0 %v844
        %901 = vmatpush.msra.mxu0 %v841
        %902 = vmatmul.f32.gmra.mxu0 %v884
        %v903 = vpop.f32.mrf.mxu0
        %v904 = vadd.f32 0.0, %v903
        %905 = vdwg.mxu0
        %906 = vmatpush.msra.mxu0 0.0
        %907 = vmatpush.msra.mxu0 0.0
        %908 = vmatpush.msra.mxu0 0.0
        %909 = vmatpush.msra.mxu0 0.0
        %910 = vmatpush.msra.mxu0 0.0
        %911 = vmatpush.msra.mxu0 0.0
        %912 = vmatpush.msra.mxu0 0.0
        %913 = vmatpush.msra.mxu0 0.0
        %914 = vmatpush.msra.mxu0 0.0
        %915 = vmatpush.msra.mxu0 0.0
        %916 = vmatpush.msra.mxu0 0.0
        %917 = vmatpush.msra.mxu0 0.0
        %918 = vmatpush.msra.mxu0 %v879
        %919 = vmatpush.msra.mxu0 %v876
        %920 = vmatpush.msra.mxu0 %v873
        %921 = vmatpush.msra.mxu0 %v870
        %922 = vmatmul.f32.gmra.mxu0 %v884
        %v923 = vpop.f32.mrf.mxu0
        %v924 = vadd.f32 0.0, %v923
        %925 = vdwg.mxu0
        %v928 = vrot.slane %v924, 4
        %v929 = vsel %vm431, %v904, %v928
        %v931 = vadd.f32 %v881, %v929
        %932 = vst [vmem:[#allocation3] sm:$0xff] %v931
        %p933 = scmp.eq.s32.totalorder %s25, 3
        // Predicated region
        $region49: #{tpu_custom_call.1} parent=43 // pred_check
          %p934 = pneg %p933
        $region50: #{tpu_custom_call.1} parent=43 // pred_check_branch
          %936 = sbr.rel (%p934) target = $region52
        $region51: #{tpu_custom_call.1} parent=43 // pred_region
          %v937 = vld [vmem:[#allocation3] sm:$0xff]
          %v938 = vmul.f32 %v937, %v937
          %940 = vst [vmem:[#allocation1] ss:$2 sm:$0xff] %v938
          %v941 = vld.sshfl [vmem:[#allocation1] sm:$0xff pattern:$0x75316420]
          %v942 = vld.sshfl [vmem:[#allocation1 + $0x8] sm:$0xff pattern:$0x75316420]
          %v945 = vsel %vm431, %v941, 0.0
          %v946 = vrot.slane %v945, 4
          %v947 = vadd.f32 %v945, %v946
          %v948 = vrot.slane %v947, 2
          %v949 = vadd.f32 %v947, %v948
          %v950 = vrot.slane %v949, 1
          %v951 = vadd.f32 %v949, %v950
          %v952 = vsel %vm431, %v942, 0.0
          %v953 = vrot.slane %v952, 4
          %v954 = vadd.f32 %v952, %v953
          %v955 = vrot.slane %v954, 2
          %v956 = vadd.f32 %v954, %v955
          %v957 = vrot.slane %v956, 1
          %v958 = vadd.f32 %v956, %v957
          %v959 = vrsqrt.pop %v951
          %v960 = vmul.f32 %v959, %v951
          %v961 = vmul.f32 %v960, %v959
          %v962 = vmul.f32 0.5, %v961
          %v963 = vsub.f32 1.5, %v962
          %v964 = vmul.f32 %v959, %v963
          %vm965 = vweird.f32 %v951
          %vm966 = vweird.f32 %v959
          %vm967 = vmor %vm965, %vm966
          %v968 = vsel %vm967, %v959, %v964
          %v969 = vrsqrt.pop %v958
          %v970 = vmul.f32 %v969, %v958
          %v971 = vmul.f32 %v970, %v969
          %v972 = vmul.f32 0.5, %v971
          %v973 = vsub.f32 1.5, %v972
          %v974 = vmul.f32 %v969, %v973
          %vm975 = vweird.f32 %v958
          %vm976 = vweird.f32 %v969
          %vm977 = vmor %vm975, %vm976
          %v978 = vsel %vm977, %v969, %v974
          %v979 = vmin.f32 %v968, 1e+12
          %v980 = vmin.f32 %v978, 1e+12
          %v983 = vrot.slane %v980, 4
          %v984 = vsel %vm431, %v979, %v983
          %v986 = vmul.f32 %v937, %v984
          %v987 = vld [vmem:[%s5] sm:$0xf]
          %989 = vset.pattern.permute.xlu0 0
          %990 = vperm.xlu0 %989, %v987
          %v991 = vpop.permute.xlu0 %990
          %v993 = vunpack.c.l.s4 839922192
          %v994 = vunpack.c.0.s8 %v993
          %v995 = vperm.slane %v991, %v994
          %v997 = vmul.f32 %v986, %v995
          %998 = vst [vmem:[%s284] sm:$0xff] %v997
        $region52: #{tpu_custom_call.1} parent=43 // pred_fallthru
          _
        %s999 = sand.u32 %s181, 1
        %s1000 = scalar_lea.sflag [#allocation5], %s999
        %s1001 = sand.u32 %s181, 1
        %s1002 = smul.addr %s1001, 8
        %s1003 = scalar_lea.vmem [#allocation4], %s1002
        // Predicated region
        $region53: #{tpu_custom_call.1} parent=43 // pred_check
          %p1004 = pneg %p191
        $region54: #{tpu_custom_call.1} parent=43 // pred_check_branch
          %1006 = sbr.rel (%p1004) target = $region56
        $region55: #{tpu_custom_call.1} parent=43 // pred_region
          %1008 = vsyncadd %s1000, 0
          %s1009 = smul.addr %s24, 2
          %s1010 = smul.addr %s1009, 4
          %s1011 = scalar_lea.hbm %s6, %s1010
          %s1013 = sshll.u32 %s1003, 4
          %s1014 = int_to_ptr.vmem [resolvable:$true] %s1013
          %s1015 = sshll.u32 %s1011, 4
          %s1016 = int_to_ptr.hbm [resolvable:$true] %s1015
          %1018 = dma.vmem_to_hbm [thread:$0]  %s1014, 128, %s1016, %s1000
        $region56: #{tpu_custom_call.1} parent=43 // pred_fallthru
          _
      $region44: #{tpu_custom_call.1} parent=5 // pred_fallthru
        _
      %p1019 = scmp.le.s32.totalorder 2, %s15
      // Predicated region
      $region57: #{tpu_custom_call.1} parent=5 // pred_check
        %p1020 = pneg %p1019
      $region58: #{tpu_custom_call.1} parent=5 // pred_check_branch
        %1022 = sbr.rel (%p1020) target = $region60
      $region59: #{tpu_custom_call.1} parent=5 // pred_region
        %s1023 = ssub.s32 %s15, 2
        // Predicated region
        $region61: #{tpu_custom_call.1} parent=59 // pred_check
          %p1024 = pneg %p197
        $region62: #{tpu_custom_call.1} parent=59 // pred_check_branch
          %1026 = sbr.rel (%p1024) target = $region64
        $region63: #{tpu_custom_call.1} parent=59 // pred_region
          %s1027 = sand.u32 %s182, 1
          %s1028 = scalar_lea.sflag [#allocation5], %s1027
          %s1029 = sand.u32 %s182, 1
          %s1030 = smul.addr %s1029, 8
          %s1031 = scalar_lea.vmem [#allocation4], %s1030
          %1033 = dma.done %s1028, 128
        $region64: #{tpu_custom_call.1} parent=59 // pred_fallthru
          _
      $region60: #{tpu_custom_call.1} parent=5 // pred_fallthru
        _
    $region6: #{tpu_custom_call.1} parent=1 // loop_footer
      %s19 = sadd.s32 1, %s15
    $region7: #{tpu_custom_call.1} parent=1 // loop_footer_branch
      %14 = sbr.rel target = $region3
    $region8: #{tpu_custom_call.1} parent=1 // loop_exit
      _
    %1034 = vsyncpa [#allocation5], 1
    %s1035 = scalar_lea.sflag [#allocation5], 1
    %1036 = vsyncpa %s1035, 1

</llo_original>
